<compile_context>
chip_gen: v5e
topology: v5e:2x2
jax: 0.10.0
libtpu: 0.0.40
codegen_flags: <defaults>
</compile_context>

<pallas_src>
import jax
import jax.numpy as jnp
from jax.experimental import pallas as pl
from jax.experimental.pallas import tpu as pltpu


def _round_up(a, b):
    return (a + b - 1) // b * b


def _vmem_limit_bytes():
    # ~75% of physical VMEM: ~96 MiB on v5e/v6e (128 MiB), ~48 MiB on v7x (64 MiB).
    try:
        cap = pltpu.get_tpu_info().vmem_capacity_bytes
    except Exception:
        cap = 64 * 1024 * 1024
    return int(cap * 3 // 4)


def _pool_sum_kernel(x_ref, sum_ref):
    # x_ref:   (R, T) tile of the (N*C, H*W) slab.
    # sum_ref: (R, 1) f32 output block, resident across the column (reduction) axis.
    @pl.when(pl.program_id(1) == 0)
    def _():
        sum_ref[...] = jnp.zeros_like(sum_ref)

    sum_ref[...] += jnp.sum(x_ref[...].astype(jnp.float32), axis=-1, keepdims=True)


def _modulate_kernel(x_ref, g_ref, o_ref):
    # Lane-dense elementwise modulation in the native input dtype.
    o_ref[...] = x_ref[...] * g_ref[...]


def channel_attention(x, w1, w2, *, tile_bytes=2 * 1024 * 1024):
    """x: (N, C, H, W); w1: (C//16, C, 1, 1); w2: (C, C//16, 1, 1)."""
    N, C, H, W = x.shape
    Cmid = w1.shape[0]
    HW = H * W
    M = N * C
    itemsize = jnp.dtype(x.dtype).itemsize

    # Row tile: multiple of 8 sublanes (covers several batch elements when C is small).
    R = min(_round_up(M, 8), 256)
    M_pad = _round_up(M, R)

    # Column tile: multiple of 128 lanes, sized so one (R, T) buffer ~ tile_bytes.
    T = max(128, (tile_bytes // (R * itemsize)) // 128 * 128)
    T = min(T, _round_up(HW, 128))
    L_pad = _round_up(HW, T)

    x2d = x.reshape(M, HW)
    if (M_pad, L_pad) != (M, HW):
        x2d = jnp.pad(x2d, ((0, M_pad - M), (0, L_pad - HW)))

    grid = (M_pad // R, L_pad // T)
    vmem_limit = _vmem_limit_bytes()

    # ---- Pass 1: streamed global-average-pool (zero padding is inert for the sum).
    sums = pl.pallas_call(
        _pool_sum_kernel,
        out_shape=jax.ShapeDtypeStruct((M_pad, 1), jnp.float32),
        grid_spec=pltpu.PrefetchScalarGridSpec(
            num_scalar_prefetch=0,
            grid=grid,
            in_specs=[pl.BlockSpec((R, T), lambda i, t: (i, t))],
            out_specs=pl.BlockSpec((R, 1), lambda i, t: (i, 0)),
        ),
        compiler_params=pltpu.CompilerParams(
            dimension_semantics=("parallel", "arbitrary"),
            vmem_limit_bytes=vmem_limit),
    )(x2d)

    # ---- Tiny squeeze/excite gate: O(N*C*Cmid) flops, kept off the hot loop (plain XLA).
    pooled = sums[:M, 0].reshape(N, C) / float(HW)                 # true-HW divisor
    w1_2d = w1.reshape(Cmid, C).astype(jnp.float32)
    w2_2d = w2.reshape(C, Cmid).astype(jnp.float32)
    y1 = pooled @ w1_2d.T                                          # (N, Cmid)
    y1 = jnp.where(y1 > 0, y1, 0.2 * y1)                           # LeakyReLU(0.2)
    gate = jax.nn.sigmoid(y1 @ w2_2d.T)                            # (N, C)
    gate2d = gate.reshape(M, 1).astype(x.dtype)                    # native dtype in hot loop
    if M_pad != M:
        gate2d = jnp.pad(gate2d, ((0, M_pad - M), (0, 0)))

    # ---- Pass 2: streamed channel-wise modulation (both grid axes parallel).
    out2d = pl.pallas_call(
        _modulate_kernel,
        out_shape=jax.ShapeDtypeStruct((M_pad, L_pad), x.dtype),
        grid_spec=pltpu.PrefetchScalarGridSpec(
            num_scalar_prefetch=0,
            grid=grid,
            in_specs=[pl.BlockSpec((R, T), lambda i, t: (i, t)),
                      pl.BlockSpec((R, 1), lambda i, t: (i, 0))],
            out_specs=pl.BlockSpec((R, T), lambda i, t: (i, t)),
        ),
        compiler_params=pltpu.CompilerParams(
            dimension_semantics=("parallel", "parallel"),
            vmem_limit_bytes=vmem_limit),
    )(x2d, gate2d)

    return out2d[:M, :HW].reshape(N, C, H, W)


def reference(x, w1, w2):
    # Pure-JAX reference of the PyTorch forward.
    pooled = jnp.mean(x, axis=(2, 3), keepdims=True)               # (N, C, 1, 1)
    y1 = jnp.einsum('nchw,mc->nmhw', pooled, w1.reshape(w1.shape[0], -1))
    y1 = jnp.where(y1 > 0, y1, 0.2 * y1)
    y2 = jnp.einsum('nmhw,cm->nchw', y1, w2.reshape(w2.shape[0], -1))
    return x * jax.nn.sigmoid(y2)


if __name__ == "__main__":
    key = jax.random.PRNGKey(0)
    k_x, k_w1, k_w2 = jax.random.split(key, 3)

    # in_channels=64 -> mid channels = 4; H=W=12 exercises the HW-padding path.
    N, C, H, W = 2, 64, 12, 12
    Cmid = C // 16

    x = jax.random.normal(k_x, (N, C, H, W), dtype=jnp.float32)
    w1 = jax.random.normal(k_w1, (Cmid, C, 1, 1), dtype=jnp.float32) * 0.1
    w2 = jax.random.normal(k_w2, (C, Cmid, 1, 1), dtype=jnp.float32) * 0.1

    fn = jax.jit(channel_attention)
    out = fn(x, w1, w2)
    jax.block_until_ready(out)

    ref = reference(x, w1, w2)
    assert out.shape == x.shape
    assert jnp.allclose(out, ref, atol=1e-5, rtol=1e-5), \
        f"max diff {jnp.max(jnp.abs(out - ref))}"

    print("KERNEL_OK")
</pallas_src>

<mosaic_0001>
module attributes {stable_mosaic.version = 11 : i64} {
  func.func @_pool_sum_kernel(%arg0: i32, %arg1: i32, %arg2: memref<128x256xf32, #tpu.memory_space<vmem>>, %arg3: memref<128x1xf32, #tpu.memory_space<vmem>>) attributes {dimension_semantics = [#tpu.dimension_semantics<parallel>, #tpu.dimension_semantics<arbitrary>], iteration_bounds = array<i64: 1, 1>, scalar_prefetch = 0 : i64, scratch_operands = 0 : i64, tpu.core_type = #tpu.core_type<tc>, window_params = [{transform_indices = @transform_0, window_bounds = array<i64: 128, 256>}, {transform_indices = @transform_1, window_bounds = array<i64: 128, 1>}]} {
    %c0_i32 = arith.constant 0 : i32
    %0 = arith.cmpi eq, %arg1, %c0_i32 : i32
    %1 = arith.extui %0 : i1 to i32
    %c0_i32_0 = arith.constant 0 : i32
    %2 = arith.cmpi ne, %1, %c0_i32_0 : i32
    scf.if %2 {
      %cst_6 = arith.constant 0.000000e+00 : f32
      %9 = vector.broadcast %cst_6 : f32 to vector<128x1xf32>
      %c0_7 = arith.constant 0 : index
      %c0_8 = arith.constant 0 : index
      %10 = vector.load %arg3[%c0_7, %c0_8] : memref<128x1xf32, #tpu.memory_space<vmem>>, vector<128x1xf32>
      tpu.vector_store %arg3[%c0_7, %c0_8], %9 {strides = array<i32>} : memref<128x1xf32, #tpu.memory_space<vmem>>, vector<128x1xf32>,
    } else {
    }
    %c0 = arith.constant 0 : index
    %c0_1 = arith.constant 0 : index
    %3 = vector.load %arg3[%c0, %c0_1] : memref<128x1xf32, #tpu.memory_space<vmem>>, vector<128x1xf32>
    %c0_2 = arith.constant 0 : index
    %c0_3 = arith.constant 0 : index
    %4 = vector.load %arg2[%c0_2, %c0_3] : memref<128x256xf32, #tpu.memory_space<vmem>>, vector<128x256xf32>
    %cst = arith.constant dense<0.000000e+00> : vector<128xf32>
    %5 = vector.multi_reduction <add>, %4, %cst [1] : vector<128x256xf32> to vector<128xf32>
    %6 = vector.shape_cast %5 : vector<128xf32> to vector<128x1xf32>
    %7 = arith.addf %3, %6 : vector<128x1xf32>
    %c0_4 = arith.constant 0 : index
    %c0_5 = arith.constant 0 : index
    %8 = vector.load %arg3[%c0_4, %c0_5] : memref<128x1xf32, #tpu.memory_space<vmem>>, vector<128x1xf32>
    tpu.vector_store %arg3[%c0_4, %c0_5], %7 {strides = array<i32>} : memref<128x1xf32, #tpu.memory_space<vmem>>, vector<128x1xf32>,
    return
  }
  func.func @transform_0(%arg0: i32, %arg1: i32) -> (i32, i32) {
    %c0_i32 = arith.constant 0 : i32
    return %arg0, %arg1 : i32, i32
  }
  func.func @transform_1(%arg0: i32, %arg1: i32) -> (i32, i32) {
    %c0_i32 = arith.constant 0 : i32
    %c0_i32_0 = arith.constant 0 : i32
    return %arg0, %c0_i32 : i32, i32
  }
}

module attributes {stable_mosaic.version = 11 : i64} {
  func.func @_modulate_kernel(%arg0: i32, %arg1: i32, %arg2: memref<128x256xf32, #tpu.memory_space<vmem>>, %arg3: memref<128x1xf32, #tpu.memory_space<vmem>>, %arg4: memref<128x256xf32, #tpu.memory_space<vmem>>) attributes {dimension_semantics = [#tpu.dimension_semantics<parallel>, #tpu.dimension_semantics<parallel>], iteration_bounds = array<i64: 1, 1>, scalar_prefetch = 0 : i64, scratch_operands = 0 : i64, tpu.core_type = #tpu.core_type<tc>, window_params = [{transform_indices = @transform_0, window_bounds = array<i64: 128, 256>}, {transform_indices = @transform_1, window_bounds = array<i64: 128, 1>}, {transform_indices = @transform_2, window_bounds = array<i64: 128, 256>}]} {
    %c0 = arith.constant 0 : index
    %c0_0 = arith.constant 0 : index
    %0 = vector.load %arg2[%c0, %c0_0] : memref<128x256xf32, #tpu.memory_space<vmem>>, vector<128x256xf32>
    %c0_1 = arith.constant 0 : index
    %c0_2 = arith.constant 0 : index
    %1 = vector.load %arg3[%c0_1, %c0_2] : memref<128x1xf32, #tpu.memory_space<vmem>>, vector<128x1xf32>
    %2 = vector.broadcast %1 : vector<128x1xf32> to vector<128x256xf32>
    %3 = arith.mulf %0, %2 : vector<128x256xf32>
    %c0_3 = arith.constant 0 : index
    %c0_4 = arith.constant 0 : index
    %4 = vector.load %arg4[%c0_3, %c0_4] : memref<128x256xf32, #tpu.memory_space<vmem>>, vector<128x256xf32>
    tpu.vector_store %arg4[%c0_3, %c0_4], %3 {strides = array<i32>} : memref<128x256xf32, #tpu.memory_space<vmem>>, vector<128x256xf32>,
    return
  }
  func.func @transform_0(%arg0: i32, %arg1: i32) -> (i32, i32) {
    %c0_i32 = arith.constant 0 : i32
    return %arg0, %arg1 : i32, i32
  }
  func.func @transform_1(%arg0: i32, %arg1: i32) -> (i32, i32) {
    %c0_i32 = arith.constant 0 : i32
    %c0_i32_0 = arith.constant 0 : i32
    return %arg0, %c0_i32 : i32, i32
  }
  func.func @transform_2(%arg0: i32, %arg1: i32) -> (i32, i32) {
    %c0_i32 = arith.constant 0 : i32
    return %arg0, %arg1 : i32, i32
  }
}

</mosaic_0001>

<llo_original>
// kernel: channel_attention.2
$region0: #{channel_attention.2}
  #allocation0 [shape = 'u32[]', space=smem, size = 0x4, offset = 0x4, fixed_abs, tag = 'smem constant byte address 0x4 - core index']
  #allocation1 [shape = 'u32[72,128]{1,0:T(1,128)}', space=vmem, size = 0x9000, scoped, tag = 'internal scratch']
  %s0 = inlined_call_operand.vmem [shape: f32[128,256], index: 0, kind: input, shape index: {}]
  %s1 = inlined_call_operand.vmem [shape: f32[128,1], index: 1, kind: output, shape index: {}]
  %s2 = sld [smem:[#allocation0]]
  $region18: #{channel_attention.2} parent=0
    _
  %s4 = ssub.s32 1, %s2
  %s5 = scalar_select 0, %s4, %s2
  // Predicated region
  $region2: #{channel_attention.2} parent=0 // pred_check
    _
  $region3: #{channel_attention.2} parent=0 // pred_check_branch
    %7 = sbr.rel (0) target = $region5
  $region4: #{channel_attention.2} parent=0 // pred_region
    _
  $region5: #{channel_attention.2} parent=0 // pred_fallthru
    _
  %p8 = scmp.eq.s32.totalorder 0, 0
  // Predicated region
  $region6: #{channel_attention.2} parent=0 // pred_check
    %p9 = pneg %p8
  $region7: #{channel_attention.2} parent=0 // pred_check_branch
    %11 = sbr.rel (%p9) target = $region9
  $region8: #{channel_attention.2} parent=0 // pred_region
    %vm12 = vcmask 7168
    %13 = vst.msk [vmem:[%s1] sm:$0xff] %vm12, 0.0
    %14 = vst.msk [vmem:[%s1 + $0x8] sm:$0xff] %vm12, 0.0
    %15 = vst.msk [vmem:[%s1 + $0x10] sm:$0xff] %vm12, 0.0
    %16 = vst.msk [vmem:[%s1 + $0x18] sm:$0xff] %vm12, 0.0
    %17 = vst.msk [vmem:[%s1 + $0x20] sm:$0xff] %vm12, 0.0
    %18 = vst.msk [vmem:[%s1 + $0x28] sm:$0xff] %vm12, 0.0
    %19 = vst.msk [vmem:[%s1 + $0x30] sm:$0xff] %vm12, 0.0
    %20 = vst.msk [vmem:[%s1 + $0x38] sm:$0xff] %vm12, 0.0
    %21 = vst.msk [vmem:[%s1 + $0x40] sm:$0xff] %vm12, 0.0
    %22 = vst.msk [vmem:[%s1 + $0x48] sm:$0xff] %vm12, 0.0
    %23 = vst.msk [vmem:[%s1 + $0x50] sm:$0xff] %vm12, 0.0
    %24 = vst.msk [vmem:[%s1 + $0x58] sm:$0xff] %vm12, 0.0
    %25 = vst.msk [vmem:[%s1 + $0x60] sm:$0xff] %vm12, 0.0
    %26 = vst.msk [vmem:[%s1 + $0x68] sm:$0xff] %vm12, 0.0
    %27 = vst.msk [vmem:[%s1 + $0x70] sm:$0xff] %vm12, 0.0
    %28 = vst.msk [vmem:[%s1 + $0x78] sm:$0xff] %vm12, 0.0
  $region9: #{channel_attention.2} parent=0 // pred_fallthru
    _
  %v29 = vld [vmem:[%s1] sm:$0xff]
  %v30 = vld [vmem:[%s1 + $0x8] sm:$0xff]
  %v31 = vld [vmem:[%s1 + $0x10] sm:$0xff]
  %v32 = vld [vmem:[%s1 + $0x18] sm:$0xff]
  %v33 = vld [vmem:[%s1 + $0x20] sm:$0xff]
  %v34 = vld [vmem:[%s1 + $0x28] sm:$0xff]
  %v35 = vld [vmem:[%s1 + $0x30] sm:$0xff]
  %v36 = vld [vmem:[%s1 + $0x38] sm:$0xff]
  %v37 = vld [vmem:[%s1 + $0x40] sm:$0xff]
  %v38 = vld [vmem:[%s1 + $0x48] sm:$0xff]
  %v39 = vld [vmem:[%s1 + $0x50] sm:$0xff]
  %v40 = vld [vmem:[%s1 + $0x58] sm:$0xff]
  %v41 = vld [vmem:[%s1 + $0x60] sm:$0xff]
  %v42 = vld [vmem:[%s1 + $0x68] sm:$0xff]
  %v43 = vld [vmem:[%s1 + $0x70] sm:$0xff]
  %v44 = vld [vmem:[%s1 + $0x78] sm:$0xff]
  %v45 = vld [vmem:[%s0] sm:$0xff]
  %v46 = vld [vmem:[%s0 + $0x8] sm:$0xff]
  %v47 = vld [vmem:[%s0 + $0x10] sm:$0xff]
  %v48 = vld [vmem:[%s0 + $0x18] sm:$0xff]
  %v49 = vld [vmem:[%s0 + $0x20] sm:$0xff]
  %v50 = vld [vmem:[%s0 + $0x28] sm:$0xff]
  %v51 = vld [vmem:[%s0 + $0x30] sm:$0xff]
  %v52 = vld [vmem:[%s0 + $0x38] sm:$0xff]
  %v53 = vld [vmem:[%s0 + $0x40] sm:$0xff]
  %v54 = vld [vmem:[%s0 + $0x48] sm:$0xff]
  %v55 = vld [vmem:[%s0 + $0x50] sm:$0xff]
  %v56 = vld [vmem:[%s0 + $0x58] sm:$0xff]
  %v57 = vld [vmem:[%s0 + $0x60] sm:$0xff]
  %v58 = vld [vmem:[%s0 + $0x68] sm:$0xff]
  %v59 = vld [vmem:[%s0 + $0x70] sm:$0xff]
  %v60 = vld [vmem:[%s0 + $0x78] sm:$0xff]
  %v61 = vld [vmem:[%s0 + $0x80] sm:$0xff]
  %v62 = vld [vmem:[%s0 + $0x88] sm:$0xff]
  %v63 = vld [vmem:[%s0 + $0x90] sm:$0xff]
  %v64 = vld [vmem:[%s0 + $0x98] sm:$0xff]
  %v65 = vld [vmem:[%s0 + $0xa0] sm:$0xff]
  %v66 = vld [vmem:[%s0 + $0xa8] sm:$0xff]
  %v67 = vld [vmem:[%s0 + $0xb0] sm:$0xff]
  %v68 = vld [vmem:[%s0 + $0xb8] sm:$0xff]
  %v69 = vld [vmem:[%s0 + $0xc0] sm:$0xff]
  %v70 = vld [vmem:[%s0 + $0xc8] sm:$0xff]
  %v71 = vld [vmem:[%s0 + $0xd0] sm:$0xff]
  %v72 = vld [vmem:[%s0 + $0xd8] sm:$0xff]
  %v73 = vld [vmem:[%s0 + $0xe0] sm:$0xff]
  %v74 = vld [vmem:[%s0 + $0xe8] sm:$0xff]
  %v75 = vld [vmem:[%s0 + $0xf0] sm:$0xff]
  %v76 = vld [vmem:[%s0 + $0xf8] sm:$0xff]
  %v77 = vadd.f32 %v45, %v46
  %78 = vadd.xlane.f32.xlu0 %v77
  %v79 = vpop.xlane.xlu0 %78
  %v80 = vadd.f32 %v47, %v48
  %81 = vadd.xlane.f32.xlu0 %v80
  %v82 = vpop.xlane.xlu0 %81
  %v83 = vadd.f32 %v49, %v50
  %84 = vadd.xlane.f32.xlu0 %v83
  %v85 = vpop.xlane.xlu0 %84
  %v86 = vadd.f32 %v51, %v52
  %87 = vadd.xlane.f32.xlu0 %v86
  %v88 = vpop.xlane.xlu0 %87
  %v89 = vadd.f32 %v53, %v54
  %90 = vadd.xlane.f32.xlu0 %v89
  %v91 = vpop.xlane.xlu0 %90
  %v92 = vadd.f32 %v55, %v56
  %93 = vadd.xlane.f32.xlu0 %v92
  %v94 = vpop.xlane.xlu0 %93
  %v95 = vadd.f32 %v57, %v58
  %96 = vadd.xlane.f32.xlu0 %v95
  %v97 = vpop.xlane.xlu0 %96
  %v98 = vadd.f32 %v59, %v60
  %99 = vadd.xlane.f32.xlu0 %v98
  %v100 = vpop.xlane.xlu0 %99
  %v101 = vadd.f32 %v61, %v62
  %102 = vadd.xlane.f32.xlu0 %v101
  %v103 = vpop.xlane.xlu0 %102
  %v104 = vadd.f32 %v63, %v64
  %105 = vadd.xlane.f32.xlu0 %v104
  %v106 = vpop.xlane.xlu0 %105
  %v107 = vadd.f32 %v65, %v66
  %108 = vadd.xlane.f32.xlu0 %v107
  %v109 = vpop.xlane.xlu0 %108
  %v110 = vadd.f32 %v67, %v68
  %111 = vadd.xlane.f32.xlu0 %v110
  %v112 = vpop.xlane.xlu0 %111
  %v113 = vadd.f32 %v69, %v70
  %114 = vadd.xlane.f32.xlu0 %v113
  %v115 = vpop.xlane.xlu0 %114
  %v116 = vadd.f32 %v71, %v72
  %117 = vadd.xlane.f32.xlu0 %v116
  %v118 = vpop.xlane.xlu0 %117
  %v119 = vadd.f32 %v73, %v74
  %120 = vadd.xlane.f32.xlu0 %v119
  %v121 = vpop.xlane.xlu0 %120
  %v122 = vadd.f32 %v75, %v76
  %123 = vadd.xlane.f32.xlu0 %v122
  %v124 = vpop.xlane.xlu0 %123
  %v125 = vadd.f32 %v29, %v79
  %v126 = vadd.f32 %v30, %v82
  %v127 = vadd.f32 %v31, %v85
  %v128 = vadd.f32 %v32, %v88
  %v129 = vadd.f32 %v33, %v91
  %v130 = vadd.f32 %v34, %v94
  %v131 = vadd.f32 %v35, %v97
  %v132 = vadd.f32 %v36, %v100
  %v133 = vadd.f32 %v37, %v103
  %v134 = vadd.f32 %v38, %v106
  %v135 = vadd.f32 %v39, %v109
  %v136 = vadd.f32 %v40, %v112
  %v137 = vadd.f32 %v41, %v115
  %v138 = vadd.f32 %v42, %v118
  %v139 = vadd.f32 %v43, %v121
  %v140 = vadd.f32 %v44, %v124
  %vm141 = vcmask 7168
  %142 = vst.msk [vmem:[%s1] sm:$0xff] %vm141, %v125
  %143 = vst.msk [vmem:[%s1 + $0x8] sm:$0xff] %vm141, %v126
  %144 = vst.msk [vmem:[%s1 + $0x10] sm:$0xff] %vm141, %v127
  %145 = vst.msk [vmem:[%s1 + $0x18] sm:$0xff] %vm141, %v128
  %146 = vst.msk [vmem:[%s1 + $0x20] sm:$0xff] %vm141, %v129
  %147 = vst.msk [vmem:[%s1 + $0x28] sm:$0xff] %vm141, %v130
  %148 = vst.msk [vmem:[%s1 + $0x30] sm:$0xff] %vm141, %v131
  %149 = vst.msk [vmem:[%s1 + $0x38] sm:$0xff] %vm141, %v132
  %150 = vst.msk [vmem:[%s1 + $0x40] sm:$0xff] %vm141, %v133
  %151 = vst.msk [vmem:[%s1 + $0x48] sm:$0xff] %vm141, %v134
  %152 = vst.msk [vmem:[%s1 + $0x50] sm:$0xff] %vm141, %v135
  %153 = vst.msk [vmem:[%s1 + $0x58] sm:$0xff] %vm141, %v136
  %154 = vst.msk [vmem:[%s1 + $0x60] sm:$0xff] %vm141, %v137
  %155 = vst.msk [vmem:[%s1 + $0x68] sm:$0xff] %vm141, %v138
  %156 = vst.msk [vmem:[%s1 + $0x70] sm:$0xff] %vm141, %v139
  %157 = vst.msk [vmem:[%s1 + $0x78] sm:$0xff] %vm141, %v140
  // Predicated region
  $region10: #{channel_attention.2} parent=0 // pred_check
    _
  $region11: #{channel_attention.2} parent=0 // pred_check_branch
    %159 = sbr.rel (0) target = $region13
  $region12: #{channel_attention.2} parent=0 // pred_region
    _
  $region13: #{channel_attention.2} parent=0 // pred_fallthru
    _
  // Predicated region
  $region14: #{channel_attention.2} parent=0 // pred_check
    _
  $region15: #{channel_attention.2} parent=0 // pred_check_branch
    %161 = sbr.rel (0) target = $region17
  $region16: #{channel_attention.2} parent=0 // pred_region
    _
  $region17: #{channel_attention.2} parent=0 // pred_fallthru
    _

// kernel: channel_attention.3
$region0: #{channel_attention.3}
  #allocation0 [shape = 'u32[]', space=smem, size = 0x4, offset = 0x4, fixed_abs, tag = 'smem constant byte address 0x4 - core index']
  #allocation1 [shape = 'u32[72,128]{1,0:T(1,128)}', space=vmem, size = 0x9000, scoped, tag = 'internal scratch']
  %s0 = inlined_call_operand.vmem [shape: f32[128,256], index: 0, kind: input, shape index: {}]
  %s1 = inlined_call_operand.vmem [shape: f32[128,1], index: 1, kind: input, shape index: {}]
  %s2 = inlined_call_operand.vmem [shape: f32[128,256], index: 2, kind: output, shape index: {}]
  %s3 = sld [smem:[#allocation0]]
  $region18: #{channel_attention.3} parent=0
    _
  %s5 = ssub.s32 1, %s3
  %s6 = scalar_select 0, %s5, %s3
  // Predicated region
  $region2: #{channel_attention.3} parent=0 // pred_check
    _
  $region3: #{channel_attention.3} parent=0 // pred_check_branch
    %8 = sbr.rel (0) target = $region5
  $region4: #{channel_attention.3} parent=0 // pred_region
    _
  $region5: #{channel_attention.3} parent=0 // pred_fallthru
    _
  // Predicated region
  $region6: #{channel_attention.3} parent=0 // pred_check
    _
  $region7: #{channel_attention.3} parent=0 // pred_check_branch
    %10 = sbr.rel (0) target = $region9
  $region8: #{channel_attention.3} parent=0 // pred_region
    _
  $region9: #{channel_attention.3} parent=0 // pred_fallthru
    _
  %v11 = vld [vmem:[%s0] sm:$0xff]
  %v12 = vld [vmem:[%s0 + $0x8] sm:$0xff]
  %v13 = vld [vmem:[%s0 + $0x10] sm:$0xff]
  %v14 = vld [vmem:[%s0 + $0x18] sm:$0xff]
  %v15 = vld [vmem:[%s0 + $0x20] sm:$0xff]
  %v16 = vld [vmem:[%s0 + $0x28] sm:$0xff]
  %v17 = vld [vmem:[%s0 + $0x30] sm:$0xff]
  %v18 = vld [vmem:[%s0 + $0x38] sm:$0xff]
  %v19 = vld [vmem:[%s0 + $0x40] sm:$0xff]
  %v20 = vld [vmem:[%s0 + $0x48] sm:$0xff]
  %v21 = vld [vmem:[%s0 + $0x50] sm:$0xff]
  %v22 = vld [vmem:[%s0 + $0x58] sm:$0xff]
  %v23 = vld [vmem:[%s0 + $0x60] sm:$0xff]
  %v24 = vld [vmem:[%s0 + $0x68] sm:$0xff]
  %v25 = vld [vmem:[%s0 + $0x70] sm:$0xff]
  %v26 = vld [vmem:[%s0 + $0x78] sm:$0xff]
  %v27 = vld [vmem:[%s0 + $0x80] sm:$0xff]
  %v28 = vld [vmem:[%s0 + $0x88] sm:$0xff]
  %v29 = vld [vmem:[%s0 + $0x90] sm:$0xff]
  %v30 = vld [vmem:[%s0 + $0x98] sm:$0xff]
  %v31 = vld [vmem:[%s0 + $0xa0] sm:$0xff]
  %v32 = vld [vmem:[%s0 + $0xa8] sm:$0xff]
  %v33 = vld [vmem:[%s0 + $0xb0] sm:$0xff]
  %v34 = vld [vmem:[%s0 + $0xb8] sm:$0xff]
  %v35 = vld [vmem:[%s0 + $0xc0] sm:$0xff]
  %v36 = vld [vmem:[%s0 + $0xc8] sm:$0xff]
  %v37 = vld [vmem:[%s0 + $0xd0] sm:$0xff]
  %v38 = vld [vmem:[%s0 + $0xd8] sm:$0xff]
  %v39 = vld [vmem:[%s0 + $0xe0] sm:$0xff]
  %v40 = vld [vmem:[%s0 + $0xe8] sm:$0xff]
  %v41 = vld [vmem:[%s0 + $0xf0] sm:$0xff]
  %v42 = vld [vmem:[%s0 + $0xf8] sm:$0xff]
  %v43 = vld [vmem:[%s1] sm:$0xff]
  %v44 = vld [vmem:[%s1 + $0x8] sm:$0xff]
  %v45 = vld [vmem:[%s1 + $0x10] sm:$0xff]
  %v46 = vld [vmem:[%s1 + $0x18] sm:$0xff]
  %v47 = vld [vmem:[%s1 + $0x20] sm:$0xff]
  %v48 = vld [vmem:[%s1 + $0x28] sm:$0xff]
  %v49 = vld [vmem:[%s1 + $0x30] sm:$0xff]
  %v50 = vld [vmem:[%s1 + $0x38] sm:$0xff]
  %v51 = vld [vmem:[%s1 + $0x40] sm:$0xff]
  %v52 = vld [vmem:[%s1 + $0x48] sm:$0xff]
  %v53 = vld [vmem:[%s1 + $0x50] sm:$0xff]
  %v54 = vld [vmem:[%s1 + $0x58] sm:$0xff]
  %v55 = vld [vmem:[%s1 + $0x60] sm:$0xff]
  %v56 = vld [vmem:[%s1 + $0x68] sm:$0xff]
  %v57 = vld [vmem:[%s1 + $0x70] sm:$0xff]
  %v58 = vld [vmem:[%s1 + $0x78] sm:$0xff]
  %60 = vset.pattern.permute.xlu0 0
  %61 = vperm.xlu0 %60, %v43
  %v62 = vpop.permute.xlu0 %61
  %65 = vset.pattern.permute.xlu0 0
  %66 = vperm.xlu0 %65, %v44
  %v67 = vpop.permute.xlu0 %66
  %70 = vset.pattern.permute.xlu0 0
  %71 = vperm.xlu0 %70, %v45
  %v72 = vpop.permute.xlu0 %71
  %75 = vset.pattern.permute.xlu0 0
  %76 = vperm.xlu0 %75, %v46
  %v77 = vpop.permute.xlu0 %76
  %80 = vset.pattern.permute.xlu0 0
  %81 = vperm.xlu0 %80, %v47
  %v82 = vpop.permute.xlu0 %81
  %85 = vset.pattern.permute.xlu0 0
  %86 = vperm.xlu0 %85, %v48
  %v87 = vpop.permute.xlu0 %86
  %90 = vset.pattern.permute.xlu0 0
  %91 = vperm.xlu0 %90, %v49
  %v92 = vpop.permute.xlu0 %91
  %95 = vset.pattern.permute.xlu0 0
  %96 = vperm.xlu0 %95, %v50
  %v97 = vpop.permute.xlu0 %96
  %100 = vset.pattern.permute.xlu0 0
  %101 = vperm.xlu0 %100, %v51
  %v102 = vpop.permute.xlu0 %101
  %105 = vset.pattern.permute.xlu0 0
  %106 = vperm.xlu0 %105, %v52
  %v107 = vpop.permute.xlu0 %106
  %110 = vset.pattern.permute.xlu0 0
  %111 = vperm.xlu0 %110, %v53
  %v112 = vpop.permute.xlu0 %111
  %115 = vset.pattern.permute.xlu0 0
  %116 = vperm.xlu0 %115, %v54
  %v117 = vpop.permute.xlu0 %116
  %120 = vset.pattern.permute.xlu0 0
  %121 = vperm.xlu0 %120, %v55
  %v122 = vpop.permute.xlu0 %121
  %125 = vset.pattern.permute.xlu0 0
  %126 = vperm.xlu0 %125, %v56
  %v127 = vpop.permute.xlu0 %126
  %130 = vset.pattern.permute.xlu0 0
  %131 = vperm.xlu0 %130, %v57
  %v132 = vpop.permute.xlu0 %131
  %135 = vset.pattern.permute.xlu0 0
  %136 = vperm.xlu0 %135, %v58
  %v137 = vpop.permute.xlu0 %136
  %v139 = vmul.f32 %v11, %v62
  %v140 = vmul.f32 %v12, %v62
  %v141 = vmul.f32 %v13, %v67
  %v142 = vmul.f32 %v14, %v67
  %v143 = vmul.f32 %v15, %v72
  %v144 = vmul.f32 %v16, %v72
  %v145 = vmul.f32 %v17, %v77
  %v146 = vmul.f32 %v18, %v77
  %v147 = vmul.f32 %v19, %v82
  %v148 = vmul.f32 %v20, %v82
  %v149 = vmul.f32 %v21, %v87
  %v150 = vmul.f32 %v22, %v87
  %v151 = vmul.f32 %v23, %v92
  %v152 = vmul.f32 %v24, %v92
  %v153 = vmul.f32 %v25, %v97
  %v154 = vmul.f32 %v26, %v97
  %v155 = vmul.f32 %v27, %v102
  %v156 = vmul.f32 %v28, %v102
  %v157 = vmul.f32 %v29, %v107
  %v158 = vmul.f32 %v30, %v107
  %v159 = vmul.f32 %v31, %v112
  %v160 = vmul.f32 %v32, %v112
  %v161 = vmul.f32 %v33, %v117
  %v162 = vmul.f32 %v34, %v117
  %v163 = vmul.f32 %v35, %v122
  %v164 = vmul.f32 %v36, %v122
  %v165 = vmul.f32 %v37, %v127
  %v166 = vmul.f32 %v38, %v127
  %v167 = vmul.f32 %v39, %v132
  %v168 = vmul.f32 %v40, %v132
  %v169 = vmul.f32 %v41, %v137
  %v170 = vmul.f32 %v42, %v137
  %171 = vst [vmem:[%s2] sm:$0xff] %v139
  %172 = vst [vmem:[%s2 + $0x8] sm:$0xff] %v140
  %173 = vst [vmem:[%s2 + $0x10] sm:$0xff] %v141
  %174 = vst [vmem:[%s2 + $0x18] sm:$0xff] %v142
  %175 = vst [vmem:[%s2 + $0x20] sm:$0xff] %v143
  %176 = vst [vmem:[%s2 + $0x28] sm:$0xff] %v144
  %177 = vst [vmem:[%s2 + $0x30] sm:$0xff] %v145
  %178 = vst [vmem:[%s2 + $0x38] sm:$0xff] %v146
  %179 = vst [vmem:[%s2 + $0x40] sm:$0xff] %v147
  %180 = vst [vmem:[%s2 + $0x48] sm:$0xff] %v148
  %181 = vst [vmem:[%s2 + $0x50] sm:$0xff] %v149
  %182 = vst [vmem:[%s2 + $0x58] sm:$0xff] %v150
  %183 = vst [vmem:[%s2 + $0x60] sm:$0xff] %v151
  %184 = vst [vmem:[%s2 + $0x68] sm:$0xff] %v152
  %185 = vst [vmem:[%s2 + $0x70] sm:$0xff] %v153
  %186 = vst [vmem:[%s2 + $0x78] sm:$0xff] %v154
  %187 = vst [vmem:[%s2 + $0x80] sm:$0xff] %v155
  %188 = vst [vmem:[%s2 + $0x88] sm:$0xff] %v156
  %189 = vst [vmem:[%s2 + $0x90] sm:$0xff] %v157
  %190 = vst [vmem:[%s2 + $0x98] sm:$0xff] %v158
  %191 = vst [vmem:[%s2 + $0xa0] sm:$0xff] %v159
  %192 = vst [vmem:[%s2 + $0xa8] sm:$0xff] %v160
  %193 = vst [vmem:[%s2 + $0xb0] sm:$0xff] %v161
  %194 = vst [vmem:[%s2 + $0xb8] sm:$0xff] %v162
  %195 = vst [vmem:[%s2 + $0xc0] sm:$0xff] %v163
  %196 = vst [vmem:[%s2 + $0xc8] sm:$0xff] %v164
  %197 = vst [vmem:[%s2 + $0xd0] sm:$0xff] %v165
  %198 = vst [vmem:[%s2 + $0xd8] sm:$0xff] %v166
  %199 = vst [vmem:[%s2 + $0xe0] sm:$0xff] %v167
  %200 = vst [vmem:[%s2 + $0xe8] sm:$0xff] %v168
  %201 = vst [vmem:[%s2 + $0xf0] sm:$0xff] %v169
  %202 = vst [vmem:[%s2 + $0xf8] sm:$0xff] %v170
  // Predicated region
  $region10: #{channel_attention.3} parent=0 // pred_check
    _
  $region11: #{channel_attention.3} parent=0 // pred_check_branch
    %204 = sbr.rel (0) target = $region13
  $region12: #{channel_attention.3} parent=0 // pred_region
    _
  $region13: #{channel_attention.3} parent=0 // pred_fallthru
    _
  // Predicated region
  $region14: #{channel_attention.3} parent=0 // pred_check
    _
  $region15: #{channel_attention.3} parent=0 // pred_check_branch
    %206 = sbr.rel (0) target = $region17
  $region16: #{channel_attention.3} parent=0 // pred_region
    _
  $region17: #{channel_attention.3} parent=0 // pred_fallthru
    _

</llo_original>
